<compile_context>
chip_gen: v6e
topology: v6e:2x2x1
jax: 0.10.0
libtpu: 0.0.40
codegen_flags: <defaults>
</compile_context>

<pallas_src>
import functools

import jax
import jax.numpy as jnp
from jax.experimental import pallas as pl
from jax.experimental.pallas import tpu as pltpu


def _autoencoder_kernel(inv_keep, keep_threshold, apply_dropout,
                        stats_ref, x_ref, rnd_ref,
                        w1_ref, b1_ref, w2_ref, b2_ref,
                        w3_ref, b3_ref, w4_ref, b4_ref,
                        hidden_ref, out_ref):
    hs = hidden_ref.shape[-1]
    mxu_dtype = w1_ref.dtype            # bf16 (or f32) MXU operand dtype

    # Apply the globally-computed layer_norm statistics: (x - mean) * rstd (f32 VPU).
    mean = stats_ref[0]
    rstd = stats_ref[1]
    x = (x_ref[...] - mean) * rstd

    def dropout(a, rbits):
        if not apply_dropout:
            return a
        keep = rbits < keep_threshold   # int32 compare; P(keep) = 1 - p
        return jnp.where(keep, a * inv_keep, 0.0)

    # Lin1: InputSize -> HiddenSize, relu, dropout
    h = jnp.dot(x.astype(mxu_dtype), w1_ref[...],
                preferred_element_type=jnp.float32) + b1_ref[...]
    h = jnp.maximum(h, 0.0)
    h = dropout(h, rnd_ref[:, :hs])

    # Lin2: 16 -> HiddenSize   (the "Hidden" output)
    hid = jnp.dot(h.astype(mxu_dtype), w2_ref[...],
                  preferred_element_type=jnp.float32) + b2_ref[...]
    hidden_ref[...] = hid

    # TransLin1: HiddenSize -> 16, relu, dropout
    y = jnp.dot(hid.astype(mxu_dtype), w3_ref[...],
                preferred_element_type=jnp.float32) + b3_ref[...]
    y = jnp.maximum(y, 0.0)
    y = dropout(y, rnd_ref[:, hs:])

    # TransLin2: HiddenSize -> InputSize (reconstruction)
    y = jnp.dot(y.astype(mxu_dtype), w4_ref[...],
                preferred_element_type=jnp.float32) + b4_ref[...]
    out_ref[...] = y


def spectrum_fnn_autoencoder(x, params, seed, dropout_p=0.2, *, training=True,
                             mxu_dtype=jnp.bfloat16, batch_tile=256):
    """Forward pass of SpectrumFNNAutoEncoder as one batch-tiled pallas_call.

    params: dict of pre-transposed weights w_i with shape (in_features, out_features)
    (PyTorch stores (out, in)) and biases b_i with shape (out,) or (1, out), float32.
    Returns (Hidden, reconstruction), both float32.
    """
    x = jnp.asarray(x, jnp.float32)
    B, d_in = x.shape
    hs = params["w1"].shape[1]                 # HiddenSize
    d_mid = params["w3"].shape[1]              # TransLin1 output width (16)
    assert params["w4"].shape[1] == d_in, "TransLin2 must map back to InputSize"
    assert params["w2"].shape[0] == hs, "module requires HiddenSize == 16 (Lin2 input)"

    # ---- global layer_norm stats (over ALL elements, biased var, eps=1e-5) ----
    # Computed once here so the batch grid can run per-tile without changing numerics.
    mean = jnp.mean(x)
    var = jnp.mean(jnp.square(x - mean))
    rstd = jax.lax.rsqrt(var + 1e-5)
    stats = jnp.stack([mean, rstd]).astype(jnp.float32)      # -> SMEM scalars

    # ---- dropout randomness: one draw covering both dropout sites ----
    apply_dropout = bool(training) and float(dropout_p) > 0.0
    rbits = jax.random.bits(jax.random.PRNGKey(seed), (B, hs + d_mid), dtype=jnp.uint32)
    rnd = (rbits >> 1).astype(jnp.int32)                     # uniform on [0, 2^31)
    if float(dropout_p) >= 1.0:
        keep_threshold, inv_keep = 0, 0.0                    # drop everything
    else:
        keep_threshold = int((1.0 - float(dropout_p)) * (1 << 31))
        inv_keep = 1.0 / (1.0 - float(dropout_p))

    # ---- weights: bf16 into the MXU; biases stay f32 broadcast rows ----
    def _w(name):
        return params[name].astype(mxu_dtype)

    def _b(name):
        return params[name].reshape(1, -1).astype(jnp.float32)

    w1, w2, w3, w4 = _w("w1"), _w("w2"), _w("w3"), _w("w4")
    b1, b2, b3, b4 = _b("b1"), _b("b2"), _b("b3"), _b("b4")

    # ---- batch tiling: MXU-sized row blocks; "parallel" for v7x megacore ----
    assert batch_tile % 8 == 0, "batch tile must be a sublane multiple"
    tb = B if B <= batch_tile else batch_tile
    grid = (pl.cdiv(B, tb),)

    row = lambda w: pl.BlockSpec((tb, w), lambda i: (i, 0))               # batch-tiled
    full = lambda a: pl.BlockSpec(a.shape, lambda i: (0,) * a.ndim)       # resident

    w_elems = sum(int(params[k].size) for k in ("w1", "w2", "w3", "w4"))
    b_elems = sum(int(params[k].size) for k in ("b1", "b2", "b3", "b4"))
    cost = pl.CostEstimate(
        flops=2 * B * w_elems,
        transcendentals=0,
        bytes_accessed=(B * d_in * 4                      # x in
                        + B * (hs + d_mid) * 4            # dropout bits
                        + w_elems * jnp.dtype(mxu_dtype).itemsize
                        + (b_elems + 2) * 4               # biases + LN stats
                        + B * hs * 4 + B * d_in * 4),     # outputs
    )

    kernel = functools.partial(_autoencoder_kernel, inv_keep, keep_threshold,
                               apply_dropout)

    hidden, recon = pl.pallas_call(
        kernel,
        grid=grid,
        out_shape=(
            jax.ShapeDtypeStruct((B, hs), jnp.float32),     # Hidden
            jax.ShapeDtypeStruct((B, d_in), jnp.float32),   # reconstruction
        ),
        in_specs=[
            pl.BlockSpec(memory_space=pltpu.MemorySpace.SMEM),   # layer-norm stats
            row(d_in),                                           # x tile
            row(hs + d_mid),                                     # dropout bits tile
            full(w1), full(b1), full(w2), full(b2),
            full(w3), full(b3), full(w4), full(b4),
        ],
        out_specs=(row(hs), row(d_in)),
        compiler_params=pltpu.CompilerParams(
            dimension_semantics=("parallel",)),
        cost_estimate=cost,
    )(stats, x, rnd, w1, b1, w2, b2, w3, b3, w4, b4)
    return hidden, recon


def _init_linear(key, fan_in, fan_out):
    """nn.Linear-style init: U(-1/sqrt(fan_in), 1/sqrt(fan_in)).
    Weight returned already transposed to (fan_in, fan_out)."""
    kw, kb = jax.random.split(key)
    bound = 1.0 / (fan_in ** 0.5)
    w = jax.random.uniform(kw, (fan_in, fan_out), minval=-bound, maxval=bound,
                           dtype=jnp.float32)
    b = jax.random.uniform(kb, (fan_out,), minval=-bound, maxval=bound,
                           dtype=jnp.float32)
    return w, b


if __name__ == "__main__":
    InputSize = 64
    HiddenSize = 16   # required for the module's layer chain to be shape-consistent
    Batch = 8

    key = jax.random.PRNGKey(0)
    kx, k1, k2, k3, k4 = jax.random.split(key, 5)

    x = jax.random.normal(kx, (Batch, InputSize), dtype=jnp.float32)

    w1, b1 = _init_linear(k1, InputSize, HiddenSize)    # Lin1
    w2, b2 = _init_linear(k2, 16, HiddenSize)           # Lin2
    w3, b3 = _init_linear(k3, HiddenSize, 16)           # TransLin1
    w4, b4 = _init_linear(k4, HiddenSize, InputSize)    # TransLin2

    params = {"w1": w1, "b1": b1, "w2": w2, "b2": b2,
              "w3": w3, "b3": b3, "w4": w4, "b4": b4}

    hidden, recon = spectrum_fnn_autoencoder(x, params, seed=0, dropout_p=0.2)
    jax.block_until_ready((hidden, recon))

    assert hidden.shape == (Batch, HiddenSize)
    assert recon.shape == (Batch, InputSize)
    assert hidden.dtype == jnp.float32 and recon.dtype == jnp.float32
    assert bool(jnp.all(jnp.isfinite(hidden))) and bool(jnp.all(jnp.isfinite(recon)))

    print("KERNEL_OK")
</pallas_src>

<mosaic_0001>
module attributes {stable_mosaic.version = 11 : i64} {
  func.func @_autoencoder_kernel(%arg0: i32, %arg1: memref<2xf32, #tpu.memory_space<smem>>, %arg2: memref<8x64xf32, #tpu.memory_space<vmem>>, %arg3: memref<8x32xi32, #tpu.memory_space<vmem>>, %arg4: memref<64x16xbf16, #tpu.memory_space<vmem>>, %arg5: memref<1x16xf32, #tpu.memory_space<vmem>>, %arg6: memref<16x16xbf16, #tpu.memory_space<vmem>>, %arg7: memref<1x16xf32, #tpu.memory_space<vmem>>, %arg8: memref<16x16xbf16, #tpu.memory_space<vmem>>, %arg9: memref<1x16xf32, #tpu.memory_space<vmem>>, %arg10: memref<16x64xbf16, #tpu.memory_space<vmem>>, %arg11: memref<1x64xf32, #tpu.memory_space<vmem>>, %arg12: memref<8x16xf32, #tpu.memory_space<vmem>>, %arg13: memref<8x64xf32, #tpu.memory_space<vmem>>) attributes {dimension_semantics = [#tpu.dimension_semantics<parallel>], iteration_bounds = array<i64: 1>, scalar_prefetch = 0 : i64, scratch_operands = 0 : i64, tpu.core_type = #tpu.core_type<tc>, window_params = [{transform_indices = @transform_0, window_bounds = array<i64: 2>}, {transform_indices = @transform_1, window_bounds = array<i64: 8, 64>}, {transform_indices = @transform_2, window_bounds = array<i64: 8, 32>}, {pipeline_mode = #tpu.pipeline_mode<synchronous>, transform_indices = @transform_3, window_bounds = array<i64: 64, 16>}, {pipeline_mode = #tpu.pipeline_mode<synchronous>, transform_indices = @transform_4, window_bounds = array<i64: 1, 16>}, {pipeline_mode = #tpu.pipeline_mode<synchronous>, transform_indices = @transform_5, window_bounds = array<i64: 16, 16>}, {pipeline_mode = #tpu.pipeline_mode<synchronous>, transform_indices = @transform_6, window_bounds = array<i64: 1, 16>}, {pipeline_mode = #tpu.pipeline_mode<synchronous>, transform_indices = @transform_7, window_bounds = array<i64: 16, 16>}, {pipeline_mode = #tpu.pipeline_mode<synchronous>, transform_indices = @transform_8, window_bounds = array<i64: 1, 16>}, {pipeline_mode = #tpu.pipeline_mode<synchronous>, transform_indices = @transform_9, window_bounds = array<i64: 16, 64>}, {pipeline_mode = #tpu.pipeline_mode<synchronous>, transform_indices = @transform_10, window_bounds = array<i64: 1, 64>}, {transform_indices = @transform_11, window_bounds = array<i64: 8, 16>}, {transform_indices = @transform_12, window_bounds = array<i64: 8, 64>}]} {
    %c0 = arith.constant 0 : index
    %0 = memref.load %arg1[%c0] : memref<2xf32, #tpu.memory_space<smem>>
    %c1 = arith.constant 1 : index
    %1 = memref.load %arg1[%c1] : memref<2xf32, #tpu.memory_space<smem>>
    %c0_0 = arith.constant 0 : index
    %c0_1 = arith.constant 0 : index
    %2 = vector.load %arg2[%c0_0, %c0_1] : memref<8x64xf32, #tpu.memory_space<vmem>>, vector<8x64xf32>
    %3 = vector.broadcast %0 : f32 to vector<8x64xf32>
    %4 = arith.subf %2, %3 : vector<8x64xf32>
    %5 = vector.broadcast %1 : f32 to vector<8x64xf32>
    %6 = arith.mulf %4, %5 : vector<8x64xf32>
    %7 = arith.truncf %6 : vector<8x64xf32> to vector<8x64xbf16>
    %c0_2 = arith.constant 0 : index
    %c0_3 = arith.constant 0 : index
    %8 = vector.load %arg4[%c0_2, %c0_3] : memref<64x16xbf16, #tpu.memory_space<vmem>>, vector<64x16xbf16>
    %cst = arith.constant dense<0.000000e+00> : vector<8x16xf32>
    %9 = tpu.matmul %7, %8, %cst {dimension_numbers = #tpu.dot_dimension_numbers<[1], [0], [0], [1], [0, 0, 1, 1], [], []>} : vector<8x64xbf16>, vector<64x16xbf16>, vector<8x16xf32> -> vector<8x16xf32>
    %c0_4 = arith.constant 0 : index
    %c0_5 = arith.constant 0 : index
    %10 = vector.load %arg5[%c0_4, %c0_5] : memref<1x16xf32, #tpu.memory_space<vmem>>, vector<1x16xf32>
    %11 = vector.broadcast %10 : vector<1x16xf32> to vector<8x16xf32>
    %12 = arith.addf %9, %11 : vector<8x16xf32>
    %cst_6 = arith.constant 0.000000e+00 : f32
    %13 = vector.broadcast %cst_6 : f32 to vector<8x16xf32>
    %14 = arith.maximumf %12, %13 : vector<8x16xf32>
    %c0_7 = arith.constant 0 : index
    %c0_8 = arith.constant 0 : index
    %15 = vector.load %arg3[%c0_7, %c0_8] : memref<8x32xi32, #tpu.memory_space<vmem>>, vector<8x16xi32>
    %c1717986918_i32 = arith.constant 1717986918 : i32
    %16 = vector.broadcast %c1717986918_i32 : i32 to vector<8x16xi32>
    %17 = arith.cmpi slt, %15, %16 : vector<8x16xi32>
    %cst_9 = arith.constant 1.250000e+00 : f32
    %18 = vector.broadcast %cst_9 : f32 to vector<8x16xf32>
    %19 = arith.mulf %14, %18 : vector<8x16xf32>
    %cst_10 = arith.constant 0.000000e+00 : f32
    %20 = vector.broadcast %cst_10 : f32 to vector<8x16xf32>
    %21 = arith.select %17, %19, %20 : vector<8x16xi1>, vector<8x16xf32>
    %22 = arith.truncf %21 : vector<8x16xf32> to vector<8x16xbf16>
    %c0_11 = arith.constant 0 : index
    %c0_12 = arith.constant 0 : index
    %23 = vector.load %arg6[%c0_11, %c0_12] : memref<16x16xbf16, #tpu.memory_space<vmem>>, vector<16x16xbf16>
    %cst_13 = arith.constant dense<0.000000e+00> : vector<8x16xf32>
    %24 = tpu.matmul %22, %23, %cst_13 {dimension_numbers = #tpu.dot_dimension_numbers<[1], [0], [0], [1], [0, 0, 1, 1], [], []>} : vector<8x16xbf16>, vector<16x16xbf16>, vector<8x16xf32> -> vector<8x16xf32>
    %c0_14 = arith.constant 0 : index
    %c0_15 = arith.constant 0 : index
    %25 = vector.load %arg7[%c0_14, %c0_15] : memref<1x16xf32, #tpu.memory_space<vmem>>, vector<1x16xf32>
    %26 = vector.broadcast %25 : vector<1x16xf32> to vector<8x16xf32>
    %27 = arith.addf %24, %26 : vector<8x16xf32>
    %c0_16 = arith.constant 0 : index
    %c0_17 = arith.constant 0 : index
    %28 = vector.load %arg12[%c0_16, %c0_17] : memref<8x16xf32, #tpu.memory_space<vmem>>, vector<8x16xf32>
    tpu.vector_store %arg12[%c0_16, %c0_17], %27 {strides = array<i32>} : memref<8x16xf32, #tpu.memory_space<vmem>>, vector<8x16xf32>,
    %29 = arith.truncf %27 : vector<8x16xf32> to vector<8x16xbf16>
    %c0_18 = arith.constant 0 : index
    %c0_19 = arith.constant 0 : index
    %30 = vector.load %arg8[%c0_18, %c0_19] : memref<16x16xbf16, #tpu.memory_space<vmem>>, vector<16x16xbf16>
    %cst_20 = arith.constant dense<0.000000e+00> : vector<8x16xf32>
    %31 = tpu.matmul %29, %30, %cst_20 {dimension_numbers = #tpu.dot_dimension_numbers<[1], [0], [0], [1], [0, 0, 1, 1], [], []>} : vector<8x16xbf16>, vector<16x16xbf16>, vector<8x16xf32> -> vector<8x16xf32>
    %c0_21 = arith.constant 0 : index
    %c0_22 = arith.constant 0 : index
    %32 = vector.load %arg9[%c0_21, %c0_22] : memref<1x16xf32, #tpu.memory_space<vmem>>, vector<1x16xf32>
    %33 = vector.broadcast %32 : vector<1x16xf32> to vector<8x16xf32>
    %34 = arith.addf %31, %33 : vector<8x16xf32>
    %cst_23 = arith.constant 0.000000e+00 : f32
    %35 = vector.broadcast %cst_23 : f32 to vector<8x16xf32>
    %36 = arith.maximumf %34, %35 : vector<8x16xf32>
    %c0_24 = arith.constant 0 : index
    %c16 = arith.constant 16 : index
    %37 = vector.load %arg3[%c0_24, %c16] : memref<8x32xi32, #tpu.memory_space<vmem>>, vector<8x16xi32>
    %c1717986918_i32_25 = arith.constant 1717986918 : i32
    %38 = vector.broadcast %c1717986918_i32_25 : i32 to vector<8x16xi32>
    %39 = arith.cmpi slt, %37, %38 : vector<8x16xi32>
    %cst_26 = arith.constant 1.250000e+00 : f32
    %40 = vector.broadcast %cst_26 : f32 to vector<8x16xf32>
    %41 = arith.mulf %36, %40 : vector<8x16xf32>
    %cst_27 = arith.constant 0.000000e+00 : f32
    %42 = vector.broadcast %cst_27 : f32 to vector<8x16xf32>
    %43 = arith.select %39, %41, %42 : vector<8x16xi1>, vector<8x16xf32>
    %44 = arith.truncf %43 : vector<8x16xf32> to vector<8x16xbf16>
    %c0_28 = arith.constant 0 : index
    %c0_29 = arith.constant 0 : index
    %45 = vector.load %arg10[%c0_28, %c0_29] : memref<16x64xbf16, #tpu.memory_space<vmem>>, vector<16x64xbf16>
    %cst_30 = arith.constant dense<0.000000e+00> : vector<8x64xf32>
    %46 = tpu.matmul %44, %45, %cst_30 {dimension_numbers = #tpu.dot_dimension_numbers<[1], [0], [0], [1], [0, 0, 1, 1], [], []>} : vector<8x16xbf16>, vector<16x64xbf16>, vector<8x64xf32> -> vector<8x64xf32>
    %c0_31 = arith.constant 0 : index
    %c0_32 = arith.constant 0 : index
    %47 = vector.load %arg11[%c0_31, %c0_32] : memref<1x64xf32, #tpu.memory_space<vmem>>, vector<1x64xf32>
    %48 = vector.broadcast %47 : vector<1x64xf32> to vector<8x64xf32>
    %49 = arith.addf %46, %48 : vector<8x64xf32>
    %c0_33 = arith.constant 0 : index
    %c0_34 = arith.constant 0 : index
    %50 = vector.load %arg13[%c0_33, %c0_34] : memref<8x64xf32, #tpu.memory_space<vmem>>, vector<8x64xf32>
    tpu.vector_store %arg13[%c0_33, %c0_34], %49 {strides = array<i32>} : memref<8x64xf32, #tpu.memory_space<vmem>>, vector<8x64xf32>,
    return
  }
  func.func @transform_0(%arg0: i32) -> i32 {
    %c0_i32 = arith.constant 0 : i32
    %c0_i32_0 = arith.constant 0 : i32
    return %c0_i32 : i32
  }
  func.func @transform_1(%arg0: i32) -> (i32, i32) {
    %c0_i32 = arith.constant 0 : i32
    %c0_i32_0 = arith.constant 0 : i32
    return %arg0, %c0_i32 : i32, i32
  }
  func.func @transform_2(%arg0: i32) -> (i32, i32) {
    %c0_i32 = arith.constant 0 : i32
    %c0_i32_0 = arith.constant 0 : i32
    return %arg0, %c0_i32 : i32, i32
  }
  func.func @transform_3(%arg0: i32) -> (i32, i32) {
    %c0_i32 = arith.constant 0 : i32
    %c0_i32_0 = arith.constant 0 : i32
    %c0_i32_1 = arith.constant 0 : i32
    return %c0_i32, %c0_i32_0 : i32, i32
  }
  func.func @transform_4(%arg0: i32) -> (i32, i32) {
    %c0_i32 = arith.constant 0 : i32
    %c0_i32_0 = arith.constant 0 : i32
    %c0_i32_1 = arith.constant 0 : i32
    return %c0_i32, %c0_i32_0 : i32, i32
  }
  func.func @transform_5(%arg0: i32) -> (i32, i32) {
    %c0_i32 = arith.constant 0 : i32
    %c0_i32_0 = arith.constant 0 : i32
    %c0_i32_1 = arith.constant 0 : i32
    return %c0_i32, %c0_i32_0 : i32, i32
  }
  func.func @transform_6(%arg0: i32) -> (i32, i32) {
    %c0_i32 = arith.constant 0 : i32
    %c0_i32_0 = arith.constant 0 : i32
    %c0_i32_1 = arith.constant 0 : i32
    return %c0_i32, %c0_i32_0 : i32, i32
  }
  func.func @transform_7(%arg0: i32) -> (i32, i32) {
    %c0_i32 = arith.constant 0 : i32
    %c0_i32_0 = arith.constant 0 : i32
    %c0_i32_1 = arith.constant 0 : i32
    return %c0_i32, %c0_i32_0 : i32, i32
  }
  func.func @transform_8(%arg0: i32) -> (i32, i32) {
    %c0_i32 = arith.constant 0 : i32
    %c0_i32_0 = arith.constant 0 : i32
    %c0_i32_1 = arith.constant 0 : i32
    return %c0_i32, %c0_i32_0 : i32, i32
  }
  func.func @transform_9(%arg0: i32) -> (i32, i32) {
    %c0_i32 = arith.constant 0 : i32
    %c0_i32_0 = arith.constant 0 : i32
    %c0_i32_1 = arith.constant 0 : i32
    return %c0_i32, %c0_i32_0 : i32, i32
  }
  func.func @transform_10(%arg0: i32) -> (i32, i32) {
    %c0_i32 = arith.constant 0 : i32
    %c0_i32_0 = arith.constant 0 : i32
    %c0_i32_1 = arith.constant 0 : i32
    return %c0_i32, %c0_i32_0 : i32, i32
  }
  func.func @transform_11(%arg0: i32) -> (i32, i32) {
    %c0_i32 = arith.constant 0 : i32
    %c0_i32_0 = arith.constant 0 : i32
    return %arg0, %c0_i32 : i32, i32
  }
  func.func @transform_12(%arg0: i32) -> (i32, i32) {
    %c0_i32 = arith.constant 0 : i32
    %c0_i32_0 = arith.constant 0 : i32
    return %arg0, %c0_i32 : i32, i32
  }
}

</mosaic_0001>

<llo_original>
// kernel: tpu_custom_call.1
$region0: #{tpu_custom_call.1}
  #allocation0 [shape = 'u32[]', space=smem, size = 0x4, offset = 0x4, fixed_abs, tag = 'smem constant byte address 0x4 - core index']
  #allocation1 [shape = 'u32[144,128]{1,0:T(1,128)}', space=vmem, size = 0x12000, scoped, tag = 'internal scratch']
  %s0 = inlined_call_operand.hbm [shape: f32[2], index: 0, kind: input, shape index: {}]
  %s1 = inlined_call_operand.vmem [shape: f32[8,64], index: 1, kind: input, shape index: {}]
  %s2 = inlined_call_operand.vmem [shape: s32[8,32], index: 2, kind: input, shape index: {}]
  %s3 = inlined_call_operand.vmem [shape: bf16[64,16], index: 3, kind: input, shape index: {}]
  %s4 = inlined_call_operand.vmem [shape: f32[1,16], index: 4, kind: input, shape index: {}]
  %s5 = inlined_call_operand.vmem [shape: bf16[16,16], index: 5, kind: input, shape index: {}]
  %s6 = inlined_call_operand.vmem [shape: f32[1,16], index: 6, kind: input, shape index: {}]
  %s7 = inlined_call_operand.vmem [shape: bf16[16,16], index: 7, kind: input, shape index: {}]
  %s8 = inlined_call_operand.vmem [shape: f32[1,16], index: 8, kind: input, shape index: {}]
  %s9 = inlined_call_operand.vmem [shape: bf16[16,64], index: 9, kind: input, shape index: {}]
  %s10 = inlined_call_operand.vmem [shape: f32[1,64], index: 10, kind: input, shape index: {}]
  %s11 = inlined_call_operand.hbm [shape: f32[8,16], index: 11, kind: output, shape index: {0}]
  %s12 = inlined_call_operand.hbm [shape: f32[8,64], index: 12, kind: output, shape index: {1}]
  %13 = xla_tuple %s11, %s12
  %s14 = sld [smem:[#allocation0]]
  $region66: #{tpu_custom_call.1} parent=0
    _
  %s16 = ssub.s32 1, %s14
  %s17 = scalar_select 0, %s16, %s14
  $region1: #{tpu_custom_call.1} parent=0
    #allocation2 [shape = 'u8[512]{0}', space=smem, size = 0x200, scoped, tag = 'input window, operand 0, single buffered']
    #allocation3 [shape = 's32[1]{0}', space=sflag, size = 0x4, scoped, tag = 'scoped memory for tpu_custom_call.1']
    #allocation4 [shape = 's32[1]{0}', space=sflag, size = 0x4, scoped, tag = 'scoped memory for tpu_custom_call.1']
    #allocation5 [shape = 'u8[4096]{0}', space=vmem, size = 0x1000, scoped, tag = 'output window, operand 0, single buffered']
    #allocation6 [shape = 'u8[4096]{0}', space=vmem, size = 0x1000, scoped, tag = 'output window, operand 1, single buffered']
    #allocation7 [shape = 's32[1]{0}', space=sflag, size = 0x4, scoped, tag = 'scoped memory for tpu_custom_call.1']
    %18 = vsyncpa [#allocation4], 0
    %19 = vsyncpa [#allocation3], 0
    %20 = vsyncpa [#allocation7], 0
    // Predicated region
    $region2: #{tpu_custom_call.1} parent=1 // pred_check
      _
    $region3: #{tpu_custom_call.1} parent=1 // pred_check_branch
      %22 = sbr.rel (0) target = $region5
    $region4: #{tpu_custom_call.1} parent=1 // pred_region
      %s24 = ssub.s32 16, 16
      %25 = vsyncadd [#allocation4], %s24
      %28 = dma.hbm_to_smem %s0, 16, [#allocation2], [#allocation4]
    $region5: #{tpu_custom_call.1} parent=1 // pred_fallthru
      _
    // Predicated region
    $region6: #{tpu_custom_call.1} parent=1 // pred_check
      _
    $region7: #{tpu_custom_call.1} parent=1 // pred_check_branch
      %30 = sbr.rel (0) target = $region9
    $region8: #{tpu_custom_call.1} parent=1 // pred_region
      _
    $region9: #{tpu_custom_call.1} parent=1 // pred_fallthru
      _
    // Predicated region
    $region10: #{tpu_custom_call.1} parent=1 // pred_check
      _
    $region11: #{tpu_custom_call.1} parent=1 // pred_check_branch
      %32 = sbr.rel (0) target = $region13
    $region12: #{tpu_custom_call.1} parent=1 // pred_region
      _
    $region13: #{tpu_custom_call.1} parent=1 // pred_fallthru
      _
    // Predicated region
    $region14: #{tpu_custom_call.1} parent=1 // pred_check
      _
    $region15: #{tpu_custom_call.1} parent=1 // pred_check_branch
      %34 = sbr.rel (0) target = $region17
    $region16: #{tpu_custom_call.1} parent=1 // pred_region
      _
    $region17: #{tpu_custom_call.1} parent=1 // pred_fallthru
      _
    // Predicated region
    $region18: #{tpu_custom_call.1} parent=1 // pred_check
      _
    $region19: #{tpu_custom_call.1} parent=1 // pred_check_branch
      %36 = sbr.rel (0) target = $region21
    $region20: #{tpu_custom_call.1} parent=1 // pred_region
      _
    $region21: #{tpu_custom_call.1} parent=1 // pred_fallthru
      _
    // Predicated region
    $region22: #{tpu_custom_call.1} parent=1 // pred_check
      _
    $region23: #{tpu_custom_call.1} parent=1 // pred_check_branch
      %38 = sbr.rel (0) target = $region25
    $region24: #{tpu_custom_call.1} parent=1 // pred_region
      _
    $region25: #{tpu_custom_call.1} parent=1 // pred_fallthru
      _
    // Predicated region
    $region26: #{tpu_custom_call.1} parent=1 // pred_check
      _
    $region27: #{tpu_custom_call.1} parent=1 // pred_check_branch
      %40 = sbr.rel (0) target = $region29
    $region28: #{tpu_custom_call.1} parent=1 // pred_region
      _
    $region29: #{tpu_custom_call.1} parent=1 // pred_fallthru
      _
    // Predicated region
    $region30: #{tpu_custom_call.1} parent=1 // pred_check
      _
    $region31: #{tpu_custom_call.1} parent=1 // pred_check_branch
      %42 = sbr.rel (0) target = $region33
    $region32: #{tpu_custom_call.1} parent=1 // pred_region
      _
    $region33: #{tpu_custom_call.1} parent=1 // pred_fallthru
      _
    // Predicated region
    $region34: #{tpu_custom_call.1} parent=1 // pred_check
      _
    $region35: #{tpu_custom_call.1} parent=1 // pred_check_branch
      %44 = sbr.rel (0) target = $region37
    $region36: #{tpu_custom_call.1} parent=1 // pred_region
      _
    $region37: #{tpu_custom_call.1} parent=1 // pred_fallthru
      _
    // Predicated region
    $region38: #{tpu_custom_call.1} parent=1 // pred_check
      _
    $region39: #{tpu_custom_call.1} parent=1 // pred_check_branch
      %46 = sbr.rel (0) target = $region41
    $region40: #{tpu_custom_call.1} parent=1 // pred_region
      _
    $region41: #{tpu_custom_call.1} parent=1 // pred_fallthru
      _
    // Predicated region
    $region42: #{tpu_custom_call.1} parent=1 // pred_check
      _
    $region43: #{tpu_custom_call.1} parent=1 // pred_check_branch
      %48 = sbr.rel (0) target = $region45
    $region44: #{tpu_custom_call.1} parent=1 // pred_region
      _
    $region45: #{tpu_custom_call.1} parent=1 // pred_fallthru
      _
    // Predicated region
    $region46: #{tpu_custom_call.1} parent=1 // pred_check
      _
    $region47: #{tpu_custom_call.1} parent=1 // pred_check_branch
      %50 = sbr.rel (0) target = $region49
    $region48: #{tpu_custom_call.1} parent=1 // pred_region
      %51 = dma.done [#allocation4], 16
    $region49: #{tpu_custom_call.1} parent=1 // pred_fallthru
      _
    %52 = sfence
    %s54 = sld [smem:[#allocation2]]
    %s55 = sld [smem:[#allocation2 + $0x1]]
    %v56 = vld [vmem:[%s1] sm:$0xff]
    %v57 = vstv %s54
    %v58 = vsub.f32 %v56, %v57
    %v59 = vstv %s55
    %v60 = vmul.f32 %v58, %v59
    %v61 = vpack.c.bf16 %v60, %v60
    %v62 = vld [vmem:[%s3] sm:$0xf]
    %v63 = vld [vmem:[%s3 + $0x4] sm:$0xf]
    %v64 = vld [vmem:[%s3 + $0x8] sm:$0xf]
    %v65 = vld [vmem:[%s3 + $0xc] sm:$0xf]
    %v66 = vld [vmem:[%s3 + $0x10] sm:$0xf]
    %v67 = vld [vmem:[%s3 + $0x14] sm:$0xf]
    %v68 = vld [vmem:[%s3 + $0x18] sm:$0xf]
    %v69 = vld [vmem:[%s3 + $0x1c] sm:$0xf]
    %v70 = vld [vmem:[%s4] sm:$0x1]
    %v72 = vlaneseq
    %v73 = vshrl.u32 %v72, 7
    %v74 = vsub.s32 0, %v73
    %v75 = vrot.slane %v70, %v74
    %v85 = vunpack.c.l.b16 %v62
    %v86 = vunpack.c.l.b16 %v63
    %v87 = vunpack.c.l.b16 %v64
    %v88 = vunpack.c.l.b16 %v65
    %v89 = vunpack.c.l.b16 %v66
    %v90 = vunpack.c.l.b16 %v67
    %v91 = vunpack.c.l.b16 %v68
    %v92 = vunpack.c.l.b16 %v69
    %v93 = vpack.c.b16 %v86, %v85
    %v94 = vpack.c.b16 %v88, %v87
    %v95 = vpack.c.b16 %v90, %v89
    %v96 = vpack.c.b16 %v92, %v91
    %vm101 = vcmask 523264
    %v103 = vsel %vm101, %v61, 0
    %105 = vmatprep.subr.bf16.mxu0 0
    %106 = vmatpush1.bf16.msra.mxu0 0
    %107 = vmatprep.subr.bf16.mxu0 0
    %108 = vmatpush1.bf16.msra.mxu0 0
    %109 = vmatprep.subr.bf16.mxu0 0
    %110 = vmatpush1.bf16.msra.mxu0 0
    %111 = vmatprep.subr.bf16.mxu0 0
    %112 = vmatpush1.bf16.msra.mxu0 0
    %113 = vmatprep.subr.bf16.mxu0 0
    %114 = vmatpush1.bf16.msra.mxu0 %v96
    %115 = vmatprep.subr.bf16.mxu0 0
    %116 = vmatpush1.bf16.msra.mxu0 %v95
    %117 = vmatprep.subr.bf16.mxu0 0
    %118 = vmatpush1.bf16.msra.mxu0 %v94
    %119 = vmatprep.subr.bf16.mxu0 0
    %120 = vmatpush1.bf16.msra.mxu0 %v93
    %121 = vmatprep.subr.bf16.mxu0 0
    %122 = vmatpush2.bf16.msra.mxu0 0
    %123 = vmatprep.subr.bf16.mxu0 0
    %124 = vmatpush2.bf16.msra.mxu0 0
    %125 = vmatprep.subr.bf16.mxu0 0
    %126 = vmatpush2.bf16.msra.mxu0 0
    %127 = vmatprep.subr.bf16.mxu0 0
    %128 = vmatpush2.bf16.msra.mxu0 0
    %129 = vmatprep.subr.bf16.mxu0 0
    %130 = vmatpush2.bf16.msra.mxu0 0
    %131 = vmatprep.subr.bf16.mxu0 0
    %132 = vmatpush2.bf16.msra.mxu0 0
    %133 = vmatprep.subr.bf16.mxu0 0
    %134 = vmatpush2.bf16.msra.mxu0 0
    %135 = vmatprep.subr.bf16.mxu0 0
    %136 = vmatpush2.bf16.msra.mxu0 0
    %137 = vmatprep.mubr.bf16.mxu0 0
    %138 = vmatmul.mubr.bf16.gmra.mxu0 %v103
    %v139 = vpop.f32.mrf.mxu0
    %v140 = vadd.f32 %v75, %v139
    %v141 = vpop.f32.mrf.mxu0
    %v142 = vpop.f32.mrf.mxu0
    %v143 = vpop.f32.mrf.mxu0
    %144 = vdwg.mxu0
    %v145 = vmax.f32 %v140, 0.0
    %v146 = vld [vmem:[%s2] sm:$0xff]
    %vm147 = vcmp.lt.s32.totalorder %v146, 1717986918
    %v148 = vmul.f32 %v145, 1.25
    %v149 = vsel %vm147, %v148, 0.0
    %v150 = vpack.c.bf16 %v149, %v149
    %v151 = vld [vmem:[%s5] sm:$0xf]
    %v152 = vld [vmem:[%s5 + $0x4] sm:$0xf]
    %v153 = vld [vmem:[%s6] sm:$0x1]
    %v155 = vlaneseq
    %v156 = vshrl.u32 %v155, 7
    %v157 = vsub.s32 0, %v156
    %v158 = vrot.slane %v153, %v157
    %v162 = vunpack.c.l.b16 %v151
    %v163 = vunpack.c.l.b16 %v152
    %v164 = vpack.c.b16 %v163, %v162
    %vm166 = vcmask 130048
    %v168 = vsel %vm166, %v150, 0
    %170 = vmatprep.subr.bf16.mxu0 0
    %171 = vmatpush1.bf16.msra.mxu0 0
    %172 = vmatprep.subr.bf16.mxu0 0
    %173 = vmatpush1.bf16.msra.mxu0 0
    %174 = vmatprep.subr.bf16.mxu0 0
    %175 = vmatpush1.bf16.msra.mxu0 0
    %176 = vmatprep.subr.bf16.mxu0 0
    %177 = vmatpush1.bf16.msra.mxu0 0
    %178 = vmatprep.subr.bf16.mxu0 0
    %179 = vmatpush1.bf16.msra.mxu0 0
    %180 = vmatprep.subr.bf16.mxu0 0
    %181 = vmatpush1.bf16.msra.mxu0 0
    %182 = vmatprep.subr.bf16.mxu0 0
    %183 = vmatpush1.bf16.msra.mxu0 0
    %184 = vmatprep.subr.bf16.mxu0 0
    %185 = vmatpush1.bf16.msra.mxu0 %v164
    %186 = vmatprep.subr.bf16.mxu0 0
    %187 = vmatpush2.bf16.msra.mxu0 0
    %188 = vmatprep.subr.bf16.mxu0 0
    %189 = vmatpush2.bf16.msra.mxu0 0
    %190 = vmatprep.subr.bf16.mxu0 0
    %191 = vmatpush2.bf16.msra.mxu0 0
    %192 = vmatprep.subr.bf16.mxu0 0
    %193 = vmatpush2.bf16.msra.mxu0 0
    %194 = vmatprep.subr.bf16.mxu0 0
    %195 = vmatpush2.bf16.msra.mxu0 0
    %196 = vmatprep.subr.bf16.mxu0 0
    %197 = vmatpush2.bf16.msra.mxu0 0
    %198 = vmatprep.subr.bf16.mxu0 0
    %199 = vmatpush2.bf16.msra.mxu0 0
    %200 = vmatprep.subr.bf16.mxu0 0
    %201 = vmatpush2.bf16.msra.mxu0 0
    %202 = vmatprep.mubr.bf16.mxu0 0
    %203 = vmatmul.mubr.bf16.gmra.mxu0 %v168
    %v204 = vpop.f32.mrf.mxu0
    %v205 = vadd.f32 %v158, %v204
    %v206 = vpop.f32.mrf.mxu0
    %v207 = vpop.f32.mrf.mxu0
    %v208 = vpop.f32.mrf.mxu0
    %209 = vdwg.mxu0
    %210 = vst.msk [vmem:[#allocation5] sm:$0xff] %vm166, %v205
    %v211 = vpack.c.bf16 %v205, %v205
    %v212 = vld [vmem:[%s7] sm:$0xf]
    %v213 = vld [vmem:[%s7 + $0x4] sm:$0xf]
    %v214 = vld [vmem:[%s8] sm:$0x1]
    %v216 = vlaneseq
    %v217 = vshrl.u32 %v216, 7
    %v218 = vsub.s32 0, %v217
    %v219 = vrot.slane %v214, %v218
    %v223 = vunpack.c.l.b16 %v212
    %v224 = vunpack.c.l.b16 %v213
    %v225 = vpack.c.b16 %v224, %v223
    %v228 = vsel %vm166, %v211, 0
    %230 = vmatprep.subr.bf16.mxu0 0
    %231 = vmatpush1.bf16.msra.mxu0 0
    %232 = vmatprep.subr.bf16.mxu0 0
    %233 = vmatpush1.bf16.msra.mxu0 0
    %234 = vmatprep.subr.bf16.mxu0 0
    %235 = vmatpush1.bf16.msra.mxu0 0
    %236 = vmatprep.subr.bf16.mxu0 0
    %237 = vmatpush1.bf16.msra.mxu0 0
    %238 = vmatprep.subr.bf16.mxu0 0
    %239 = vmatpush1.bf16.msra.mxu0 0
    %240 = vmatprep.subr.bf16.mxu0 0
    %241 = vmatpush1.bf16.msra.mxu0 0
    %242 = vmatprep.subr.bf16.mxu0 0
    %243 = vmatpush1.bf16.msra.mxu0 0
    %244 = vmatprep.subr.bf16.mxu0 0
    %245 = vmatpush1.bf16.msra.mxu0 %v225
    %246 = vmatprep.subr.bf16.mxu0 0
    %247 = vmatpush2.bf16.msra.mxu0 0
    %248 = vmatprep.subr.bf16.mxu0 0
    %249 = vmatpush2.bf16.msra.mxu0 0
    %250 = vmatprep.subr.bf16.mxu0 0
    %251 = vmatpush2.bf16.msra.mxu0 0
    %252 = vmatprep.subr.bf16.mxu0 0
    %253 = vmatpush2.bf16.msra.mxu0 0
    %254 = vmatprep.subr.bf16.mxu0 0
    %255 = vmatpush2.bf16.msra.mxu0 0
    %256 = vmatprep.subr.bf16.mxu0 0
    %257 = vmatpush2.bf16.msra.mxu0 0
    %258 = vmatprep.subr.bf16.mxu0 0
    %259 = vmatpush2.bf16.msra.mxu0 0
    %260 = vmatprep.subr.bf16.mxu0 0
    %261 = vmatpush2.bf16.msra.mxu0 0
    %262 = vmatprep.mubr.bf16.mxu0 0
    %263 = vmatmul.mubr.bf16.gmra.mxu0 %v228
    %v264 = vpop.f32.mrf.mxu0
    %v265 = vadd.f32 %v219, %v264
    %v266 = vpop.f32.mrf.mxu0
    %v267 = vpop.f32.mrf.mxu0
    %v268 = vpop.f32.mrf.mxu0
    %269 = vdwg.mxu0
    %v270 = vmax.f32 %v265, 0.0
    %v271 = vld [vmem:[%s2] sm:$0xff]
    %vm272 = vcmp.lt.s32.totalorder %v271, 1717986918
    %v273 = vmul.f32 %v270, 1.25
    %275 = vrot.lane.b32.xlu0 %v273, 16
    %v276 = vpop.permute.xlu0 %275
    %v278 = vsel %vm272, %v276, 0.0
    %v279 = vpack.c.bf16 %v278, %v278
    %v280 = vld [vmem:[%s9] sm:$0xf]
    %v281 = vld [vmem:[%s9 + $0x4] sm:$0xf]
    %v282 = vld [vmem:[%s10] sm:$0x1]
    %v284 = vlaneseq
    %v285 = vshrl.u32 %v284, 7
    %v286 = vsub.s32 0, %v285
    %v287 = vrot.slane %v282, %v286
    %290 = vrot.lane.b32.xlu0 %v279, 112
    %v291 = vpop.permute.xlu0 %290
    %v294 = vunpack.c.l.b16 %v280
    %v295 = vunpack.c.l.b16 %v281
    %v296 = vpack.c.b16 %v295, %v294
    %v299 = vsel %vm166, %v291, 0
    %301 = vmatprep.subr.bf16.mxu0 0
    %302 = vmatpush1.bf16.msra.mxu0 0
    %303 = vmatprep.subr.bf16.mxu0 0
    %304 = vmatpush1.bf16.msra.mxu0 0
    %305 = vmatprep.subr.bf16.mxu0 0
    %306 = vmatpush1.bf16.msra.mxu0 0
    %307 = vmatprep.subr.bf16.mxu0 0
    %308 = vmatpush1.bf16.msra.mxu0 0
    %309 = vmatprep.subr.bf16.mxu0 0
    %310 = vmatpush1.bf16.msra.mxu0 0
    %311 = vmatprep.subr.bf16.mxu0 0
    %312 = vmatpush1.bf16.msra.mxu0 0
    %313 = vmatprep.subr.bf16.mxu0 0
    %314 = vmatpush1.bf16.msra.mxu0 0
    %315 = vmatprep.subr.bf16.mxu0 0
    %316 = vmatpush1.bf16.msra.mxu0 %v296
    %317 = vmatprep.subr.bf16.mxu0 0
    %318 = vmatpush2.bf16.msra.mxu0 0
    %319 = vmatprep.subr.bf16.mxu0 0
    %320 = vmatpush2.bf16.msra.mxu0 0
    %321 = vmatprep.subr.bf16.mxu0 0
    %322 = vmatpush2.bf16.msra.mxu0 0
    %323 = vmatprep.subr.bf16.mxu0 0
    %324 = vmatpush2.bf16.msra.mxu0 0
    %325 = vmatprep.subr.bf16.mxu0 0
    %326 = vmatpush2.bf16.msra.mxu0 0
    %327 = vmatprep.subr.bf16.mxu0 0
    %328 = vmatpush2.bf16.msra.mxu0 0
    %329 = vmatprep.subr.bf16.mxu0 0
    %330 = vmatpush2.bf16.msra.mxu0 0
    %331 = vmatprep.subr.bf16.mxu0 0
    %332 = vmatpush2.bf16.msra.mxu0 0
    %333 = vmatprep.mubr.bf16.mxu0 0
    %334 = vmatmul.mubr.bf16.gmra.mxu0 %v299
    %v335 = vpop.f32.mrf.mxu0
    %v336 = vadd.f32 %v287, %v335
    %v337 = vpop.f32.mrf.mxu0
    %v338 = vpop.f32.mrf.mxu0
    %v339 = vpop.f32.mrf.mxu0
    %340 = vdwg.mxu0
    %341 = vst.msk [vmem:[#allocation6] sm:$0xff] %vm101, %v336
    // Predicated region
    $region50: #{tpu_custom_call.1} parent=1 // pred_check
      _
    $region51: #{tpu_custom_call.1} parent=1 // pred_check_branch
      %343 = sbr.rel (0) target = $region53
    $region52: #{tpu_custom_call.1} parent=1 // pred_region
      %s345 = ssub.s32 128, 128
      %346 = vsyncadd [#allocation3], %s345
      %s348 = sshll.u32 [#allocation5], 4
      %s349 = int_to_ptr.vmem [resolvable:$true] %s348
      %351 = dma.vmem_to_hbm [thread:$0]  %s349, 128, %s11, [#allocation3]
    $region53: #{tpu_custom_call.1} parent=1 // pred_fallthru
      _
    // Predicated region
    $region54: #{tpu_custom_call.1} parent=1 // pred_check
      _
    $region55: #{tpu_custom_call.1} parent=1 // pred_check_branch
      %353 = sbr.rel (0) target = $region57
    $region56: #{tpu_custom_call.1} parent=1 // pred_region
      %s355 = ssub.s32 128, 128
      %356 = vsyncadd [#allocation7], %s355
      %s358 = sshll.u32 [#allocation6], 4
      %s359 = int_to_ptr.vmem [resolvable:$true] %s358
      %361 = dma.vmem_to_hbm [thread:$0]  %s359, 128, %s12, [#allocation7]
    $region57: #{tpu_custom_call.1} parent=1 // pred_fallthru
      _
    // Predicated region
    $region58: #{tpu_custom_call.1} parent=1 // pred_check
      _
    $region59: #{tpu_custom_call.1} parent=1 // pred_check_branch
      %363 = sbr.rel (0) target = $region61
    $region60: #{tpu_custom_call.1} parent=1 // pred_region
      %364 = dma.done [#allocation3], 128
    $region61: #{tpu_custom_call.1} parent=1 // pred_fallthru
      _
    // Predicated region
    $region62: #{tpu_custom_call.1} parent=1 // pred_check
      _
    $region63: #{tpu_custom_call.1} parent=1 // pred_check_branch
      %366 = sbr.rel (0) target = $region65
    $region64: #{tpu_custom_call.1} parent=1 // pred_region
      %367 = dma.done [#allocation7], 128
    $region65: #{tpu_custom_call.1} parent=1 // pred_fallthru
      _
    %368 = vsyncpa [#allocation3], 1
    %369 = vsyncpa [#allocation7], 1
    %370 = vsyncpa [#allocation4], 1

</llo_original>
